<compile_context>
chip_gen: v5e
topology: v5e:2x2
jax: 0.10.0
libtpu: 0.0.40
codegen_flags: <defaults>
</compile_context>

<pallas_src>
import math

import jax
import jax.numpy as jnp
from jax.experimental import pallas as pl
from jax.experimental.pallas import tpu as pltpu


_INV_SQRT2 = 0.7071067811865476
_SQRT_2_OVER_PI = 0.7978845608028654


def _gelu(h, approximate):
    if approximate:
        # tanh GELU: one EUP transcendental + a few VALU ops
        # (vs ~15-25 VALU ops for the erf polynomial).
        return 0.5 * h * (1.0 + jnp.tanh(_SQRT_2_OVER_PI * (h + 0.044715 * (h * h * h))))
    # exact erf GELU (torch.nn.GELU default numerics)
    return 0.5 * h * (1.0 + jax.lax.erf(h * _INV_SQRT2))


def _round_up(x, m):
    return ((x + m - 1) // m) * m


def _vmem_capacity_bytes():
    try:
        return int(pltpu.get_tpu_info().vmem_capacity_bytes)
    except Exception:
        return 64 * 1024 * 1024  # conservative default (v7x per-TensorCore VMEM)


def _choose_block_rows(c_in, c_pad, hc, op, weight_bytes, x_itemsize, g_itemsize, vmem_budget):
    """Largest row tile whose working set fits the VMEM budget.

    Weights/biases are single-buffered resident copies; x/out tiles are double-buffered
    by the pipeline; the hidden dim is processed hc columns at a time.
    """
    for tm in (2048, 1024, 512, 256, 128):
        stream = 2 * tm * (c_in + op) * x_itemsize            # pipelined x-in / out tiles
        xpad = tm * c_pad * x_itemsize if c_pad != c_in else 0  # lane-pad scratch
        # f32 h chunk + GELU chunk (x2 margin for unrolled live ranges) + f32 accumulator
        tmp = 2 * tm * hc * (4 + g_itemsize) + tm * op * 4
        if weight_bytes + stream + xpad + tmp + (2 << 20) <= vmem_budget:
            return tm
    return 128


def _make_mlp_kernel(c_in, c_pad, hc, n_chunks, approximate, gelu_dtype):
    pad_input = c_pad != c_in

    def kernel(*refs):
        if pad_input:
            x_ref, w1_ref, b1_ref, w2_ref, b2_ref, o_ref, xp_ref = refs

            # Zero the lane-padding columns once; they stay zero across the whole grid.
            @pl.when(pl.program_id(0) == 0)
            def _zero():
                xp_ref[...] = jnp.zeros(xp_ref.shape, xp_ref.dtype)

            xp_ref[:, 0:c_in] = x_ref[...]
            x = xp_ref[...]
        else:
            x_ref, w1_ref, b1_ref, w2_ref, b2_ref, o_ref = refs
            x = x_ref[...]

        tm = x.shape[0]
        op = o_ref.shape[1]
        acc = jnp.zeros((tm, op), jnp.float32)

        # Static (fully unrolled) chunk loop over the hidden dim: the scheduler can
        # overlap chunk k's MXU matmuls with chunk k-1's GELU VALU/EUP work, and the
        # peak f32 intermediate is (tm, hc) instead of (tm, Hp).
        for k in range(n_chunks):
            lo = k * hc
            hi = lo + hc
            h = jnp.dot(x, w1_ref[:, lo:hi], preferred_element_type=jnp.float32)
            h = h + b1_ref[:, lo:hi]                        # bias pre-cast to f32 once
            g = _gelu(h.astype(gelu_dtype), approximate)    # bf16 GELU on bf16 models
            acc = acc + jnp.dot(g.astype(w2_ref.dtype), w2_ref[lo:hi, :],
                                preferred_element_type=jnp.float32)

        o_ref[...] = (acc + b2_ref[...]).astype(o_ref.dtype)

    return kernel


def mlp_s_pallas(x, w1, b1, w2, b2, *, block_rows=None, h_chunk=512,
                 gelu_approximate=None, gelu_dtype=None):
    """Mlp_s forward: fc2(GELU(fc1(x))); dropout = identity (p=0.0).

    x : (B, N, C_in) tokens (channels last).
    w1: (C_in, H), b1: (H,)      (transposed vs torch nn.Linear weight layout)
    w2: (H, C_out), b2: (C_out,)
    gelu_approximate: None -> tanh GELU for bf16 models (delta below bf16 rounding),
                      exact erf GELU for f32 models (torch.nn.GELU default numerics).
    gelu_dtype: dtype for the GELU math; default = fc2 operand dtype.
                (Pass jnp.float32 on v5e, which has no bf16 VPU/EUP.)
    """
    B, N, C_in = x.shape
    H = w1.shape[1]
    C_out = w2.shape[1]
    M = B * N

    if gelu_approximate is None:
        gelu_approximate = (x.dtype == jnp.bfloat16)
    if gelu_dtype is None:
        gelu_dtype = w2.dtype

    # Lane-dense padding of hidden / output dims (applied to the small weights/biases
    # only -- x itself is never padded in HBM).  Zero padding keeps the math exact.
    Cp = _round_up(C_in, 128)
    Op = _round_up(C_out, 128)
    hc = max(128, _round_up(min(h_chunk, H), 128))
    n_chunks = -(-H // hc)
    hc = _round_up(-(-H // n_chunks), 128)
    Hp = n_chunks * hc

    x_itemsize = jnp.dtype(x.dtype).itemsize
    w_itemsize = jnp.dtype(w1.dtype).itemsize
    g_itemsize = jnp.dtype(gelu_dtype).itemsize

    vmem_limit = min(_vmem_capacity_bytes() * 3 // 4, 96 * 1024 * 1024)
    weight_bytes = (Cp * Hp + Hp * Op) * w_itemsize + (Hp + Op) * 4

    if block_rows is None:
        block_rows = _choose_block_rows(C_in, Cp, hc, Op, weight_bytes,
                                        x_itemsize, g_itemsize, vmem_limit)
    # Guarantee a multi-step grid (>=4 steps when M permits) so DMA overlaps compute;
    # on v7x this also gives each TensorCore at least 2 steps.
    tm = max(8, min(block_rows, max(8, _round_up(-(-M // 4), 8))))
    grid = (pl.cdiv(M, tm),)

    x2d = x.reshape(M, C_in)  # no HBM padding of x (rows or lanes)
    w1p = jnp.pad(w1, ((0, Cp - C_in), (0, Hp - H)))
    w2p = jnp.pad(w2, ((0, Hp - H), (0, Op - C_out)))
    b1p = jnp.pad(b1.astype(jnp.float32), (0, Hp - H)).reshape(1, Hp)
    b2p = jnp.pad(b2.astype(jnp.float32), (0, Op - C_out)).reshape(1, Op)

    kernel = _make_mlp_kernel(C_in, Cp, hc, n_chunks, gelu_approximate, gelu_dtype)

    # Whole-array VMEM operands: one resident copy (no per-step double buffering).
    resident = pl.BlockSpec(memory_space=pltpu.MemorySpace.VMEM)

    scratch_shapes = []
    if Cp != C_in:
        scratch_shapes.append(pltpu.VMEM((tm, Cp), x.dtype))

    cost = pl.CostEstimate(
        flops=2 * M * (Cp * Hp + Hp * Op),
        transcendentals=M * Hp,
        bytes_accessed=(M * C_in + M * C_out) * x_itemsize
        + (Cp * Hp + Hp * Op) * w_itemsize + (Hp + Op) * 4,
    )

    out2d = pl.pallas_call(
        kernel,
        out_shape=jax.ShapeDtypeStruct((M, Op), x.dtype),
        grid_spec=pltpu.PrefetchScalarGridSpec(
            num_scalar_prefetch=0,
            grid=grid,
            in_specs=[
                pl.BlockSpec((tm, C_in), lambda i: (i, 0)),  # x tile: streamed/pipelined
                resident,   # w1 (Cp, Hp)       -- single resident VMEM copy
                resident,   # b1 (1, Hp)  f32   -- single resident VMEM copy
                resident,   # w2 (Hp, Op)       -- single resident VMEM copy
                resident,   # b2 (1, Op)  f32   -- single resident VMEM copy
            ],
            out_specs=pl.BlockSpec((tm, Op), lambda i: (i, 0)),  # lane-dense stores
            scratch_shapes=tuple(scratch_shapes),
        ),
        compiler_params=pltpu.CompilerParams(
            # Rows are independent.  TODO(synk): on v7x verify both TensorCores get grid
            # steps; switch to pltpu.CORE_PARALLEL if the profile shows one core idle.
            dimension_semantics=("parallel",),
            vmem_limit_bytes=vmem_limit,
        ),
        cost_estimate=cost,
    )(x2d, w1p, b1p, w2p, b2p)

    out2d = out2d[:, :C_out] if Op != C_out else out2d
    return out2d.reshape(B, N, C_out)


def mlp_s_reference(x, w1, b1, w2, b2, approximate):
    xf = x.astype(jnp.float32)
    h = jnp.einsum("bnc,ch->bnh", xf, w1.astype(jnp.float32),
                   precision=jax.lax.Precision.HIGHEST) + b1.astype(jnp.float32)
    h = _gelu(h, approximate)
    o = jnp.einsum("bnh,ho->bno", h, w2.astype(jnp.float32),
                   precision=jax.lax.Precision.HIGHEST) + b2.astype(jnp.float32)
    return o  # f32


if __name__ == "__main__":
    # Shapes consistent with a Swin BasicLayer MLP: B=2, 16x16 feature map -> 256 tokens,
    # dim=32, hidden = 4*dim (mlp_ratio=4.0), out=dim.
    B = 2
    Hs = Ws = 16
    N = Hs * Ws
    in_features = 32
    hidden_features = 4 * in_features
    out_features = in_features

    key = jax.random.PRNGKey(0)
    kx, k1, kb1, k2, kb2 = jax.random.split(key, 5)

    lim1 = 1.0 / math.sqrt(in_features)
    lim2 = 1.0 / math.sqrt(hidden_features)

    x_f32 = jax.random.normal(kx, (B, N, in_features), dtype=jnp.float32)
    w1_f32 = jax.random.uniform(k1, (in_features, hidden_features), jnp.float32, -lim1, lim1)
    b1_f32 = jax.random.uniform(kb1, (hidden_features,), jnp.float32, -lim1, lim1)
    w2_f32 = jax.random.uniform(k2, (hidden_features, out_features), jnp.float32, -lim2, lim2)
    b2_f32 = jax.random.uniform(kb2, (out_features,), jnp.float32, -lim2, lim2)

    # --- bf16 path: bf16 MXU operands, f32 accumulation, bf16 tanh-GELU (v6e/v7x fast
    #     path); exercises the lane-pad scratch (C_in=32) and a 4-step pipelined grid. ---
    x_bf = x_f32.astype(jnp.bfloat16)
    w1_bf = w1_f32.astype(jnp.bfloat16)
    w2_bf = w2_f32.astype(jnp.bfloat16)

    out_bf = jax.block_until_ready(mlp_s_pallas(x_bf, w1_bf, b1_f32, w2_bf, b2_f32))
    ref_bf = mlp_s_reference(x_bf, w1_bf, b1_f32, w2_bf, b2_f32, approximate=True)
    assert out_bf.shape == (B, N, out_features)
    assert out_bf.dtype == jnp.bfloat16
    assert jnp.allclose(out_bf.astype(jnp.float32), ref_bf, atol=3e-2, rtol=3e-2)

    # --- f32 path: exact erf GELU (torch.nn.GELU default numerics). ---
    out_f32 = jax.block_until_ready(mlp_s_pallas(x_f32, w1_f32, b1_f32, w2_f32, b2_f32))
    ref_f32 = mlp_s_reference(x_f32, w1_f32, b1_f32, w2_f32, b2_f32, approximate=False)
    assert out_f32.shape == (B, N, out_features)
    assert jnp.allclose(out_f32, ref_f32, atol=5e-3, rtol=5e-3)

    # --- multi-chunk hidden dim (2 chunks of 128) + lane-aligned C_in/C_out path
    #     (no scratch, no output slice): dim=128, hidden=256, 64 tokens. ---
    kx2, k3, kb3, k4, kb4 = jax.random.split(jax.random.PRNGKey(0), 5)
    d2, h2 = 128, 256
    x2 = jax.random.normal(kx2, (1, 64, d2), dtype=jnp.float32)
    w3 = jax.random.uniform(k3, (d2, h2), jnp.float32, -1.0 / math.sqrt(d2), 1.0 / math.sqrt(d2))
    b3 = jax.random.uniform(kb3, (h2,), jnp.float32, -1.0 / math.sqrt(d2), 1.0 / math.sqrt(d2))
    w4 = jax.random.uniform(k4, (h2, d2), jnp.float32, -1.0 / math.sqrt(h2), 1.0 / math.sqrt(h2))
    b4 = jax.random.uniform(kb4, (d2,), jnp.float32, -1.0 / math.sqrt(h2), 1.0 / math.sqrt(h2))
    out2 = jax.block_until_ready(mlp_s_pallas(x2, w3, b3, w4, b4, h_chunk=128))
    ref2 = mlp_s_reference(x2, w3, b3, w4, b4, approximate=False)
    assert out2.shape == (1, 64, d2)
    assert jnp.allclose(out2, ref2, atol=5e-3, rtol=5e-3)

    print("KERNEL_OK")
</pallas_src>

<mosaic_0001>
module attributes {stable_mosaic.version = 11 : i64} {
  func.func @kernel(%arg0: i32, %arg1: memref<128x32xbf16, #tpu.memory_space<vmem>>, %arg2: memref<128x128xbf16, #tpu.memory_space<vmem>>, %arg3: memref<1x128xf32, #tpu.memory_space<vmem>>, %arg4: memref<128x128xbf16, #tpu.memory_space<vmem>>, %arg5: memref<1x128xf32, #tpu.memory_space<vmem>>, %arg6: memref<128x128xbf16, #tpu.memory_space<vmem>>, %arg7: memref<128x128xbf16, #tpu.memory_space<vmem>>) attributes {dimension_semantics = [#tpu.dimension_semantics<parallel>], iteration_bounds = array<i64: 4>, scalar_prefetch = 0 : i64, scratch_operands = 1 : i64, tpu.core_type = #tpu.core_type<tc>, window_params = [{transform_indices = @transform_0, window_bounds = array<i64: 128, 32>}, {pipeline_mode = #tpu.pipeline_mode<synchronous>, transform_indices = @transform_1, window_bounds = array<i64: 128, 128>}, {pipeline_mode = #tpu.pipeline_mode<synchronous>, transform_indices = @transform_2, window_bounds = array<i64: 1, 128>}, {pipeline_mode = #tpu.pipeline_mode<synchronous>, transform_indices = @transform_3, window_bounds = array<i64: 128, 128>}, {pipeline_mode = #tpu.pipeline_mode<synchronous>, transform_indices = @transform_4, window_bounds = array<i64: 1, 128>}, {transform_indices = @transform_5, window_bounds = array<i64: 128, 128>}]} {
    %c0_i32 = arith.constant 0 : i32
    %0 = arith.cmpi eq, %arg0, %c0_i32 : i32
    %1 = arith.extui %0 : i1 to i32
    %c0_i32_0 = arith.constant 0 : i32
    %2 = arith.cmpi ne, %1, %c0_i32_0 : i32
    scf.if %2 {
      %cst_22 = arith.constant 0.000000e+00 : bf16
      %34 = vector.broadcast %cst_22 : bf16 to vector<128x128xbf16>
      %c0_23 = arith.constant 0 : index
      %c0_24 = arith.constant 0 : index
      %35 = vector.load %arg7[%c0_23, %c0_24] : memref<128x128xbf16, #tpu.memory_space<vmem>>, vector<128x128xbf16>
      tpu.vector_store %arg7[%c0_23, %c0_24], %34 {strides = array<i32>} : memref<128x128xbf16, #tpu.memory_space<vmem>>, vector<128x128xbf16>,
    } else {
    }
    %c0 = arith.constant 0 : index
    %c0_1 = arith.constant 0 : index
    %3 = vector.load %arg1[%c0, %c0_1] : memref<128x32xbf16, #tpu.memory_space<vmem>>, vector<128x32xbf16>
    %c0_2 = arith.constant 0 : index
    %c0_3 = arith.constant 0 : index
    %4 = vector.load %arg7[%c0_2, %c0_3] : memref<128x128xbf16, #tpu.memory_space<vmem>>, vector<128x32xbf16>
    tpu.vector_store %arg7[%c0_2, %c0_3], %3 {strides = array<i32>} : memref<128x128xbf16, #tpu.memory_space<vmem>>, vector<128x32xbf16>,
    %c0_4 = arith.constant 0 : index
    %c0_5 = arith.constant 0 : index
    %5 = vector.load %arg7[%c0_4, %c0_5] : memref<128x128xbf16, #tpu.memory_space<vmem>>, vector<128x128xbf16>
    %cst = arith.constant 0.000000e+00 : f32
    %6 = vector.broadcast %cst : f32 to vector<128x128xf32>
    %c0_6 = arith.constant 0 : index
    %c0_7 = arith.constant 0 : index
    %7 = vector.load %arg2[%c0_6, %c0_7] : memref<128x128xbf16, #tpu.memory_space<vmem>>, vector<128x128xbf16>
    %cst_8 = arith.constant dense<0.000000e+00> : vector<128x128xf32>
    %8 = tpu.matmul %5, %7, %cst_8 {dimension_numbers = #tpu.dot_dimension_numbers<[1], [0], [0], [1], [0, 0, 1, 1], [], []>} : vector<128x128xbf16>, vector<128x128xbf16>, vector<128x128xf32> -> vector<128x128xf32>
    %c0_9 = arith.constant 0 : index
    %c0_10 = arith.constant 0 : index
    %9 = vector.load %arg3[%c0_9, %c0_10] : memref<1x128xf32, #tpu.memory_space<vmem>>, vector<1x128xf32>
    %10 = vector.broadcast %9 : vector<1x128xf32> to vector<128x128xf32>
    %11 = arith.addf %8, %10 : vector<128x128xf32>
    %12 = arith.truncf %11 : vector<128x128xf32> to vector<128x128xbf16>
    %cst_11 = arith.constant 5.000000e-01 : bf16
    %13 = vector.broadcast %cst_11 : bf16 to vector<128x128xbf16>
    %14 = arith.mulf %13, %12 : vector<128x128xbf16>
    %15 = arith.mulf %12, %12 : vector<128x128xbf16>
    %16 = arith.mulf %15, %12 : vector<128x128xbf16>
    %cst_12 = arith.constant 4.467770e-02 : bf16
    %17 = vector.broadcast %cst_12 : bf16 to vector<128x128xbf16>
    %18 = arith.mulf %17, %16 : vector<128x128xbf16>
    %19 = arith.addf %12, %18 : vector<128x128xbf16>
    %cst_13 = arith.constant 7.968750e-01 : bf16
    %20 = vector.broadcast %cst_13 : bf16 to vector<128x128xbf16>
    %21 = arith.mulf %20, %19 : vector<128x128xbf16>
    %22 = math.tanh %21 : vector<128x128xbf16>
    %cst_14 = arith.constant 1.000000e+00 : bf16
    %23 = vector.broadcast %cst_14 : bf16 to vector<128x128xbf16>
    %24 = arith.addf %23, %22 : vector<128x128xbf16>
    %25 = arith.mulf %14, %24 : vector<128x128xbf16>
    %c0_15 = arith.constant 0 : index
    %c0_16 = arith.constant 0 : index
    %26 = vector.load %arg4[%c0_15, %c0_16] : memref<128x128xbf16, #tpu.memory_space<vmem>>, vector<128x128xbf16>
    %cst_17 = arith.constant dense<0.000000e+00> : vector<128x128xf32>
    %27 = tpu.matmul %25, %26, %cst_17 {dimension_numbers = #tpu.dot_dimension_numbers<[1], [0], [0], [1], [0, 0, 1, 1], [], []>} : vector<128x128xbf16>, vector<128x128xbf16>, vector<128x128xf32> -> vector<128x128xf32>
    %28 = arith.addf %6, %27 : vector<128x128xf32>
    %c0_18 = arith.constant 0 : index
    %c0_19 = arith.constant 0 : index
    %29 = vector.load %arg5[%c0_18, %c0_19] : memref<1x128xf32, #tpu.memory_space<vmem>>, vector<1x128xf32>
    %30 = vector.broadcast %29 : vector<1x128xf32> to vector<128x128xf32>
    %31 = arith.addf %28, %30 : vector<128x128xf32>
    %32 = arith.truncf %31 : vector<128x128xf32> to vector<128x128xbf16>
    %c0_20 = arith.constant 0 : index
    %c0_21 = arith.constant 0 : index
    %33 = vector.load %arg6[%c0_20, %c0_21] : memref<128x128xbf16, #tpu.memory_space<vmem>>, vector<128x128xbf16>
    tpu.vector_store %arg6[%c0_20, %c0_21], %32 {strides = array<i32>} : memref<128x128xbf16, #tpu.memory_space<vmem>>, vector<128x128xbf16>,
    return
  }
  func.func @transform_0(%arg0: i32) -> (i32, i32) {
    %c0_i32 = arith.constant 0 : i32
    %c0_i32_0 = arith.constant 0 : i32
    return %arg0, %c0_i32 : i32, i32
  }
  func.func @transform_1(%arg0: i32) -> (i32, i32) {
    %c0_i32 = arith.constant 0 : i32
    %c0_i32_0 = arith.constant 0 : i32
    %c0_i32_1 = arith.constant 0 : i32
    return %c0_i32, %c0_i32_0 : i32, i32
  }
  func.func @transform_2(%arg0: i32) -> (i32, i32) {
    %c0_i32 = arith.constant 0 : i32
    %c0_i32_0 = arith.constant 0 : i32
    %c0_i32_1 = arith.constant 0 : i32
    return %c0_i32, %c0_i32_0 : i32, i32
  }
  func.func @transform_3(%arg0: i32) -> (i32, i32) {
    %c0_i32 = arith.constant 0 : i32
    %c0_i32_0 = arith.constant 0 : i32
    %c0_i32_1 = arith.constant 0 : i32
    return %c0_i32, %c0_i32_0 : i32, i32
  }
  func.func @transform_4(%arg0: i32) -> (i32, i32) {
    %c0_i32 = arith.constant 0 : i32
    %c0_i32_0 = arith.constant 0 : i32
    %c0_i32_1 = arith.constant 0 : i32
    return %c0_i32, %c0_i32_0 : i32, i32
  }
  func.func @transform_5(%arg0: i32) -> (i32, i32) {
    %c0_i32 = arith.constant 0 : i32
    %c0_i32_0 = arith.constant 0 : i32
    return %arg0, %c0_i32 : i32, i32
  }
}

</mosaic_0001>

<llo_original>
// kernel: tpu_custom_call.1
$region0: #{tpu_custom_call.1}
  #allocation0 [shape = 'u32[]', space=smem, size = 0x4, offset = 0x4, fixed_abs, tag = 'smem constant byte address 0x4 - core index']
  #allocation1 [shape = 'u32[72,128]{1,0:T(1,128)}', space=vmem, size = 0x9000, scoped, tag = 'internal scratch']
  #allocation2 [shape = 'bf16[128,128]{1,0:T(8,128)(2,1)}', space=vmem, size = 0x8000, scoped, tag = 'scratch operand']
  %s0 = inlined_call_operand.vmem [shape: bf16[512,32], index: 0, kind: input, shape index: {}]
  %s1 = inlined_call_operand.vmem [shape: bf16[128,128], index: 1, kind: input, shape index: {}]
  %s2 = inlined_call_operand.vmem [shape: f32[1,128], index: 2, kind: input, shape index: {}]
  %s3 = inlined_call_operand.vmem [shape: bf16[128,128], index: 3, kind: input, shape index: {}]
  %s4 = inlined_call_operand.vmem [shape: f32[1,128], index: 4, kind: input, shape index: {}]
  %s5 = inlined_call_operand.hbm [shape: bf16[512,128], index: 5, kind: output, shape index: {}]
  %s6 = sld [smem:[#allocation0]]
  $region57: #{tpu_custom_call.1} parent=0
    _
  %s8 = ssub.s32 1, %s6
  %s9 = scalar_select 0, %s8, %s6
  $region1: #{tpu_custom_call.1} parent=0
    #allocation3 [shape = 'u8[65536]{0}', space=vmem, size = 0x10000, scoped, tag = 'output window, operand 0']
    #allocation4 [shape = 's32[2]{0}', space=sflag, size = 0x8, scoped, tag = 'scoped memory for tpu_custom_call.1']
    %10 = vsyncpa [#allocation4], 0
    %s11 = scalar_lea.sflag [#allocation4], 1
    %12 = vsyncpa %s11, 0
    loop: start=0, step=1, limit=6
    $region2: #{tpu_custom_call.1} parent=1 // loop_pre_header
      _
    $region3: #{tpu_custom_call.1} parent=1 // loop_header
      %s14 = sphi 0, %s18
      %p15 = scmp.ge.s32.totalorder %s14, 6
      %s24 = sphi 0, %s26
      %s27 = sphi 0, %s24
      %s28 = sphi 0, %s27
      %s44 = sphi 0, %s28
      %s48 = sphi 0, %s48
      %s50 = sphi 0, %s48
      %s51 = sphi 0, %s50
      %s65 = sphi 0, %s51
      %s69 = sphi 0, %s69
      %s71 = sphi 0, %s69
      %s72 = sphi 0, %s71
      %s86 = sphi 0, %s72
      %s90 = sphi 0, %s90
      %s92 = sphi 0, %s90
      %s93 = sphi 0, %s92
      %s107 = sphi 0, %s93
      %s111 = sphi 0, %s111
      %s113 = sphi 0, %s111
      %s114 = sphi 0, %s113
      %s128 = sphi 0, %s114
      %s134 = sphi 0, %s136
      %s137 = sphi 0, %s134
      %s138 = sphi 0, %s137
      %s154 = sphi 0, %s138
    $region4: #{tpu_custom_call.1} parent=1 // loop_header_branch
      %17 = sbr.rel (%p15) target = $region8
    $region5: #{tpu_custom_call.1} parent=1 // loop_body
      %s19 = ssub.s32 %s14, 1
      %s20 = ssub.s32 %s14, 2
      %s21 = sadd.s32 %s14, 1
      %s22 = ssub.s32 %s14, %s21
      %p23 = scmp.eq.s32.totalorder %s22, 0
      %s25 = sadd.s32 %s24, 1
      %s26 = scalar_select %p23, %s24, %s25
      %p29 = pneg %p23
      %p30 = scmp.eq.s32.totalorder %s14, 3
      %p31 = por %p29, %p30
      %p32 = scmp.ne.s32.totalorder %s24, %s27
      %p33 = scmp.eq.s32.totalorder %s14, 0
      %p34 = por %p32, %p33
      %p35 = scmp.ne.s32.totalorder %s24, %s27
      %p36 = scmp.eq.s32.totalorder %s19, 3
      %p37 = por %p35, %p36
      %p38 = scmp.ne.s32.totalorder %s27, %s28
      %p39 = scmp.eq.s32.totalorder %s19, 0
      %p40 = por %p38, %p39
      %p41 = scmp.ne.s32.totalorder %s27, %s28
      %p42 = scmp.eq.s32.totalorder %s20, 3
      %p43 = por %p41, %p42
      %p45 = scmp.ne.s32.totalorder %s28, %s44
      %p46 = scmp.eq.s32.totalorder %s20, 0
      %p47 = por %p45, %p46
      %s49 = sadd.s32 %s48, 1
      %p52 = scmp.eq.s32.totalorder %s14, 3
      %p53 = scmp.ne.s32.totalorder %s48, %s50
      %p54 = scmp.eq.s32.totalorder %s14, 0
      %p55 = por %p53, %p54
      %p56 = scmp.ne.s32.totalorder %s48, %s50
      %p57 = scmp.eq.s32.totalorder %s19, 3
      %p58 = por %p56, %p57
      %p59 = scmp.ne.s32.totalorder %s50, %s51
      %p60 = scmp.eq.s32.totalorder %s19, 0
      %p61 = por %p59, %p60
      %p62 = scmp.ne.s32.totalorder %s50, %s51
      %p63 = scmp.eq.s32.totalorder %s20, 3
      %p64 = por %p62, %p63
      %p66 = scmp.ne.s32.totalorder %s51, %s65
      %p67 = scmp.eq.s32.totalorder %s20, 0
      %p68 = por %p66, %p67
      %s70 = sadd.s32 %s69, 1
      %p73 = scmp.eq.s32.totalorder %s14, 3
      %p74 = scmp.ne.s32.totalorder %s69, %s71
      %p75 = scmp.eq.s32.totalorder %s14, 0
      %p76 = por %p74, %p75
      %p77 = scmp.ne.s32.totalorder %s69, %s71
      %p78 = scmp.eq.s32.totalorder %s19, 3
      %p79 = por %p77, %p78
      %p80 = scmp.ne.s32.totalorder %s71, %s72
      %p81 = scmp.eq.s32.totalorder %s19, 0
      %p82 = por %p80, %p81
      %p83 = scmp.ne.s32.totalorder %s71, %s72
      %p84 = scmp.eq.s32.totalorder %s20, 3
      %p85 = por %p83, %p84
      %p87 = scmp.ne.s32.totalorder %s72, %s86
      %p88 = scmp.eq.s32.totalorder %s20, 0
      %p89 = por %p87, %p88
      %s91 = sadd.s32 %s90, 1
      %p94 = scmp.eq.s32.totalorder %s14, 3
      %p95 = scmp.ne.s32.totalorder %s90, %s92
      %p96 = scmp.eq.s32.totalorder %s14, 0
      %p97 = por %p95, %p96
      %p98 = scmp.ne.s32.totalorder %s90, %s92
      %p99 = scmp.eq.s32.totalorder %s19, 3
      %p100 = por %p98, %p99
      %p101 = scmp.ne.s32.totalorder %s92, %s93
      %p102 = scmp.eq.s32.totalorder %s19, 0
      %p103 = por %p101, %p102
      %p104 = scmp.ne.s32.totalorder %s92, %s93
      %p105 = scmp.eq.s32.totalorder %s20, 3
      %p106 = por %p104, %p105
      %p108 = scmp.ne.s32.totalorder %s93, %s107
      %p109 = scmp.eq.s32.totalorder %s20, 0
      %p110 = por %p108, %p109
      %s112 = sadd.s32 %s111, 1
      %p115 = scmp.eq.s32.totalorder %s14, 3
      %p116 = scmp.ne.s32.totalorder %s111, %s113
      %p117 = scmp.eq.s32.totalorder %s14, 0
      %p118 = por %p116, %p117
      %p119 = scmp.ne.s32.totalorder %s111, %s113
      %p120 = scmp.eq.s32.totalorder %s19, 3
      %p121 = por %p119, %p120
      %p122 = scmp.ne.s32.totalorder %s113, %s114
      %p123 = scmp.eq.s32.totalorder %s19, 0
      %p124 = por %p122, %p123
      %p125 = scmp.ne.s32.totalorder %s113, %s114
      %p126 = scmp.eq.s32.totalorder %s20, 3
      %p127 = por %p125, %p126
      %p129 = scmp.ne.s32.totalorder %s114, %s128
      %p130 = scmp.eq.s32.totalorder %s20, 0
      %p131 = por %p129, %p130
      %s132 = ssub.s32 %s14, %s21
      %p133 = scmp.eq.s32.totalorder %s132, 0
      %s135 = sadd.s32 %s134, 1
      %s136 = scalar_select %p133, %s134, %s135
      %p139 = pneg %p133
      %p140 = scmp.eq.s32.totalorder %s14, 3
      %p141 = por %p139, %p140
      %p142 = scmp.ne.s32.totalorder %s134, %s137
      %p143 = scmp.eq.s32.totalorder %s14, 0
      %p144 = por %p142, %p143
      %p145 = scmp.ne.s32.totalorder %s134, %s137
      %p146 = scmp.eq.s32.totalorder %s19, 3
      %p147 = por %p145, %p146
      %p148 = scmp.ne.s32.totalorder %s137, %s138
      %p149 = scmp.eq.s32.totalorder %s19, 0
      %p150 = por %p148, %p149
      %p151 = scmp.ne.s32.totalorder %s137, %s138
      %p152 = scmp.eq.s32.totalorder %s20, 3
      %p153 = por %p151, %p152
      %p155 = scmp.ne.s32.totalorder %s138, %s154
      %p156 = scmp.eq.s32.totalorder %s20, 0
      %p157 = por %p155, %p156
      %p158 = scmp.le.s32.totalorder 1, %s14
      %p159 = scmp.lt.s32.totalorder %s14, 5
      %p160 = pnand %p158, %p159
      %p161 = pneg %p160
      // Predicated region
      $region9: #{tpu_custom_call.1} parent=5 // pred_check
        _
      $region10: #{tpu_custom_call.1} parent=5 // pred_check_branch
        %163 = sbr.rel (%p160) target = $region12
      $region11: #{tpu_custom_call.1} parent=5 // pred_region
        %s164 = ssub.s32 %s14, 1
        // Predicated region
        $region13: #{tpu_custom_call.1} parent=11 // pred_check
          %p165 = pneg %p61
        $region14: #{tpu_custom_call.1} parent=11 // pred_check_branch
          %167 = sbr.rel (%p165) target = $region16
        $region15: #{tpu_custom_call.1} parent=11 // pred_region
          _
        $region16: #{tpu_custom_call.1} parent=11 // pred_fallthru
          _
        // Predicated region
        $region17: #{tpu_custom_call.1} parent=11 // pred_check
          %p168 = pneg %p82
        $region18: #{tpu_custom_call.1} parent=11 // pred_check_branch
          %170 = sbr.rel (%p168) target = $region20
        $region19: #{tpu_custom_call.1} parent=11 // pred_region
          _
        $region20: #{tpu_custom_call.1} parent=11 // pred_fallthru
          _
        // Predicated region
        $region21: #{tpu_custom_call.1} parent=11 // pred_check
          %p171 = pneg %p103
        $region22: #{tpu_custom_call.1} parent=11 // pred_check_branch
          %173 = sbr.rel (%p171) target = $region24
        $region23: #{tpu_custom_call.1} parent=11 // pred_region
          _
        $region24: #{tpu_custom_call.1} parent=11 // pred_fallthru
          _
        // Predicated region
        $region25: #{tpu_custom_call.1} parent=11 // pred_check
          %p174 = pneg %p124
        $region26: #{tpu_custom_call.1} parent=11 // pred_check_branch
          %176 = sbr.rel (%p174) target = $region28
        $region27: #{tpu_custom_call.1} parent=11 // pred_region
          _
        $region28: #{tpu_custom_call.1} parent=11 // pred_fallthru
          _
      $region12: #{tpu_custom_call.1} parent=5 // pred_fallthru
        _
      %p177 = scmp.lt.s32.totalorder %s14, 4
      // Predicated region
      $region29: #{tpu_custom_call.1} parent=5 // pred_check
        %p178 = pneg %p177
      $region30: #{tpu_custom_call.1} parent=5 // pred_check_branch
        %180 = sbr.rel (%p178) target = $region32
      $region31: #{tpu_custom_call.1} parent=5 // pred_region
        // Predicated region
        $region33: #{tpu_custom_call.1} parent=31 // pred_check
          %p181 = pneg %p34
        $region34: #{tpu_custom_call.1} parent=31 // pred_check_branch
          %183 = sbr.rel (%p181) target = $region36
        $region35: #{tpu_custom_call.1} parent=31 // pred_region
          %s184 = smul.u32 16, %s14
          %p185 = scmp.lt.s32.totalorder %s184, 63
          %s186 = scalar_select %p185, %s184, 63
          %s187 = smul.addr %s186, 4
          %s188 = scalar_lea.vmem %s0, %s187
          %s189 = smul.u32 16, %s14
        $region36: #{tpu_custom_call.1} parent=31 // pred_fallthru
          _
      $region32: #{tpu_custom_call.1} parent=5 // pred_fallthru
        _
      %p190 = scmp.le.s32.totalorder 1, %s14
      %p191 = scmp.lt.s32.totalorder %s14, 5
      %p192 = pnand %p190, %p191
      %p193 = pneg %p192
      // Predicated region
      $region37: #{tpu_custom_call.1} parent=5 // pred_check
        _
      $region38: #{tpu_custom_call.1} parent=5 // pred_check_branch
        %195 = sbr.rel (%p192) target = $region40
      $region39: #{tpu_custom_call.1} parent=5 // pred_region
        %s196 = ssub.s32 %s14, 1
        %s197 = smul.u32 16, %s19
        %p198 = scmp.lt.s32.totalorder %s197, 63
        %s199 = scalar_select %p198, %s197, 63
        %s200 = smul.addr %s199, 4
        %s201 = scalar_lea.vmem %s0, %s200
        %p202 = pneg %p40
        %p203 = pneg %p37
        %p204 = pneg %p61
        %p205 = pneg %p58
        %p206 = pneg %p82
        %p207 = pneg %p79
        %p208 = pneg %p103
        %p209 = pneg %p100
        %p210 = pneg %p124
        %p211 = pneg %p121
        %p212 = pneg %p150
        %p213 = pneg %p147
        %s214 = sand.u32 %s137, 1
        %s215 = scalar_lea.sflag [#allocation4], %s214
        %s216 = sand.u32 %s137, 1
        %s217 = smul.addr %s216, 64
        %s218 = scalar_lea.vmem [#allocation3], %s217
        %s219 = smul.u32 16, %s19
        %p220 = scmp.lt.s32.totalorder %s219, 63
        %s221 = scalar_select %p220, %s219, 63
        %s222 = smul.addr %s221, 4
        %s223 = scalar_lea.vmem %s0, %s222
        %s224 = smul.u32 16, %s19
        %s225 = smul.u32 16, %s19
        %p227 = scmp.eq.s32.totalorder %s19, 0
        // Predicated region
        $region41: #{tpu_custom_call.1} parent=39 // pred_check
          %p228 = pneg %p227
        $region42: #{tpu_custom_call.1} parent=39 // pred_check_branch
          %230 = sbr.rel (%p228) target = $region44
        $region43: #{tpu_custom_call.1} parent=39 // pred_region
          %231 = vst [vmem:[#allocation2] sm:$0xf] 0
          %232 = vst [vmem:[#allocation2 + $0x4] sm:$0xf] 0
          %233 = vst [vmem:[#allocation2 + $0x8] sm:$0xf] 0
          %234 = vst [vmem:[#allocation2 + $0xc] sm:$0xf] 0
          %235 = vst [vmem:[#allocation2 + $0x10] sm:$0xf] 0
          %236 = vst [vmem:[#allocation2 + $0x14] sm:$0xf] 0
          %237 = vst [vmem:[#allocation2 + $0x18] sm:$0xf] 0
          %238 = vst [vmem:[#allocation2 + $0x1c] sm:$0xf] 0
          %239 = vst [vmem:[#allocation2 + $0x20] sm:$0xf] 0
          %240 = vst [vmem:[#allocation2 + $0x24] sm:$0xf] 0
          %241 = vst [vmem:[#allocation2 + $0x28] sm:$0xf] 0
          %242 = vst [vmem:[#allocation2 + $0x2c] sm:$0xf] 0
          %243 = vst [vmem:[#allocation2 + $0x30] sm:$0xf] 0
          %244 = vst [vmem:[#allocation2 + $0x34] sm:$0xf] 0
          %245 = vst [vmem:[#allocation2 + $0x38] sm:$0xf] 0
          %246 = vst [vmem:[#allocation2 + $0x3c] sm:$0xf] 0
        $region44: #{tpu_custom_call.1} parent=39 // pred_fallthru
          _
        %v247 = vld [vmem:[%s223] sm:$0xf]
        %v248 = vld [vmem:[%s223 + $0x4] sm:$0xf]
        %v249 = vld [vmem:[%s223 + $0x8] sm:$0xf]
        %v250 = vld [vmem:[%s223 + $0xc] sm:$0xf]
        %v251 = vld [vmem:[%s223 + $0x10] sm:$0xf]
        %v252 = vld [vmem:[%s223 + $0x14] sm:$0xf]
        %v253 = vld [vmem:[%s223 + $0x18] sm:$0xf]
        %v254 = vld [vmem:[%s223 + $0x1c] sm:$0xf]
        %v255 = vld [vmem:[%s223 + $0x20] sm:$0xf]
        %v256 = vld [vmem:[%s223 + $0x24] sm:$0xf]
        %v257 = vld [vmem:[%s223 + $0x28] sm:$0xf]
        %v258 = vld [vmem:[%s223 + $0x2c] sm:$0xf]
        %v259 = vld [vmem:[%s223 + $0x30] sm:$0xf]
        %v260 = vld [vmem:[%s223 + $0x34] sm:$0xf]
        %v261 = vld [vmem:[%s223 + $0x38] sm:$0xf]
        %v262 = vld [vmem:[%s223 + $0x3c] sm:$0xf]
        %vm263 = vcmask 257024
        %264 = vst.msk [vmem:[#allocation2] sm:$0xf] %vm263, %v247
        %265 = vst.msk [vmem:[#allocation2 + $0x4] sm:$0xf] %vm263, %v248
        %266 = vst.msk [vmem:[#allocation2 + $0x8] sm:$0xf] %vm263, %v249
        %267 = vst.msk [vmem:[#allocation2 + $0xc] sm:$0xf] %vm263, %v250
        %268 = vst.msk [vmem:[#allocation2 + $0x10] sm:$0xf] %vm263, %v251
        %269 = vst.msk [vmem:[#allocation2 + $0x14] sm:$0xf] %vm263, %v252
        %270 = vst.msk [vmem:[#allocation2 + $0x18] sm:$0xf] %vm263, %v253
        %271 = vst.msk [vmem:[#allocation2 + $0x1c] sm:$0xf] %vm263, %v254
        %272 = vst.msk [vmem:[#allocation2 + $0x20] sm:$0xf] %vm263, %v255
        %273 = vst.msk [vmem:[#allocation2 + $0x24] sm:$0xf] %vm263, %v256
        %274 = vst.msk [vmem:[#allocation2 + $0x28] sm:$0xf] %vm263, %v257
        %275 = vst.msk [vmem:[#allocation2 + $0x2c] sm:$0xf] %vm263, %v258
        %276 = vst.msk [vmem:[#allocation2 + $0x30] sm:$0xf] %vm263, %v259
        %277 = vst.msk [vmem:[#allocation2 + $0x34] sm:$0xf] %vm263, %v260
        %278 = vst.msk [vmem:[#allocation2 + $0x38] sm:$0xf] %vm263, %v261
        %279 = vst.msk [vmem:[#allocation2 + $0x3c] sm:$0xf] %vm263, %v262
        %v280 = vld [vmem:[#allocation2] sm:$0xf]
        %v281 = vld [vmem:[#allocation2 + $0x4] sm:$0xf]
        %v282 = vld [vmem:[#allocation2 + $0x8] sm:$0xf]
        %v283 = vld [vmem:[#allocation2 + $0xc] sm:$0xf]
        %v284 = vld [vmem:[#allocation2 + $0x10] sm:$0xf]
        %v285 = vld [vmem:[#allocation2 + $0x14] sm:$0xf]
        %v286 = vld [vmem:[#allocation2 + $0x18] sm:$0xf]
        %v287 = vld [vmem:[#allocation2 + $0x1c] sm:$0xf]
        %v288 = vld [vmem:[#allocation2 + $0x20] sm:$0xf]
        %v289 = vld [vmem:[#allocation2 + $0x24] sm:$0xf]
        %v290 = vld [vmem:[#allocation2 + $0x28] sm:$0xf]
        %v291 = vld [vmem:[#allocation2 + $0x2c] sm:$0xf]
        %v292 = vld [vmem:[#allocation2 + $0x30] sm:$0xf]
        %v293 = vld [vmem:[#allocation2 + $0x34] sm:$0xf]
        %v294 = vld [vmem:[#allocation2 + $0x38] sm:$0xf]
        %v295 = vld [vmem:[#allocation2 + $0x3c] sm:$0xf]
        %v296 = vld [vmem:[%s1] sm:$0xf]
        %v297 = vld [vmem:[%s1 + $0x4] sm:$0xf]
        %v298 = vld [vmem:[%s1 + $0x8] sm:$0xf]
        %v299 = vld [vmem:[%s1 + $0xc] sm:$0xf]
        %v300 = vld [vmem:[%s1 + $0x10] sm:$0xf]
        %v301 = vld [vmem:[%s1 + $0x14] sm:$0xf]
        %v302 = vld [vmem:[%s1 + $0x18] sm:$0xf]
        %v303 = vld [vmem:[%s1 + $0x1c] sm:$0xf]
        %v304 = vld [vmem:[%s1 + $0x20] sm:$0xf]
        %v305 = vld [vmem:[%s1 + $0x24] sm:$0xf]
        %v306 = vld [vmem:[%s1 + $0x28] sm:$0xf]
        %v307 = vld [vmem:[%s1 + $0x2c] sm:$0xf]
        %v308 = vld [vmem:[%s1 + $0x30] sm:$0xf]
        %v309 = vld [vmem:[%s1 + $0x34] sm:$0xf]
        %v310 = vld [vmem:[%s1 + $0x38] sm:$0xf]
        %v311 = vld [vmem:[%s1 + $0x3c] sm:$0xf]
        %v312 = vld [vmem:[%s2] sm:$0x1]
        %v314 = vperm.slane %v312, 0
        %v332 = vunpack.c.l.b16 %v280
        %v333 = vunpack.c.l.b16 %v281
        %v334 = vunpack.c.l.b16 %v282
        %v335 = vunpack.c.l.b16 %v283
        %v336 = vunpack.c.l.b16 %v284
        %v337 = vunpack.c.l.b16 %v285
        %v338 = vunpack.c.l.b16 %v286
        %v339 = vunpack.c.l.b16 %v287
        %v340 = vunpack.c.l.b16 %v288
        %v341 = vunpack.c.l.b16 %v289
        %v342 = vunpack.c.l.b16 %v290
        %v343 = vunpack.c.l.b16 %v291
        %v344 = vunpack.c.l.b16 %v292
        %v345 = vunpack.c.l.b16 %v293
        %v346 = vunpack.c.l.b16 %v294
        %v347 = vunpack.c.l.b16 %v295
        %v348 = vpack.c.b16 %v333, %v332
        %v349 = vpack.c.b16 %v335, %v334
        %v350 = vpack.c.b16 %v337, %v336
        %v351 = vpack.c.b16 %v339, %v338
        %v352 = vpack.c.b16 %v341, %v340
        %v353 = vpack.c.b16 %v343, %v342
        %v354 = vpack.c.b16 %v345, %v344
        %v355 = vpack.c.b16 %v347, %v346
        %v380 = vunpack.c.l.b16 %v296
        %v381 = vunpack.c.l.b16 %v297
        %v382 = vunpack.c.l.b16 %v298
        %v383 = vunpack.c.l.b16 %v299
        %v384 = vunpack.c.l.b16 %v300
        %v385 = vunpack.c.l.b16 %v301
        %v386 = vunpack.c.l.b16 %v302
        %v387 = vunpack.c.l.b16 %v303
        %v388 = vunpack.c.l.b16 %v304
        %v389 = vunpack.c.l.b16 %v305
        %v390 = vunpack.c.l.b16 %v306
        %v391 = vunpack.c.l.b16 %v307
        %v392 = vunpack.c.l.b16 %v308
        %v393 = vunpack.c.l.b16 %v309
        %v394 = vunpack.c.l.b16 %v310
        %v395 = vunpack.c.l.b16 %v311
        %v396 = vpack.c.b16 %v381, %v380
        %v397 = vpack.c.b16 %v383, %v382
        %v398 = vpack.c.b16 %v385, %v384
        %v399 = vpack.c.b16 %v387, %v386
        %v400 = vpack.c.b16 %v389, %v388
        %v401 = vpack.c.b16 %v391, %v390
        %v402 = vpack.c.b16 %v393, %v392
        %v403 = vpack.c.b16 %v395, %v394
        %412 = vmatpush.bf16.msra.mxu0 %v403
        %413 = vmatpush.bf16.msra.mxu0 %v402
        %414 = vmatpush.bf16.msra.mxu0 %v401
        %415 = vmatpush.bf16.msra.mxu0 %v400
        %416 = vmatpush.bf16.msra.mxu0 %v399
        %417 = vmatpush.bf16.msra.mxu0 %v398
        %418 = vmatpush.bf16.msra.mxu0 %v397
        %419 = vmatpush.bf16.msra.mxu0 %v396
        %420 = vmatmul.bf16.gmra.mxu0 %v348
        %v421 = vpop.f32.mrf.mxu0
        %v422 = vadd.f32 %v314, %v421
        %v423 = vpop.f32.mrf.mxu0
        %v424 = vadd.f32 %v314, %v423
        %425 = vmatmul.bf16.gmra.mxu0 %v349
        %v426 = vpop.f32.mrf.mxu0
        %v427 = vadd.f32 %v314, %v426
        %v428 = vpop.f32.mrf.mxu0
        %v429 = vadd.f32 %v314, %v428
        %430 = vmatmul.bf16.gmra.mxu0 %v350
        %v431 = vpop.f32.mrf.mxu0
        %v432 = vadd.f32 %v314, %v431
        %v433 = vpop.f32.mrf.mxu0
        %v434 = vadd.f32 %v314, %v433
        %435 = vmatmul.bf16.gmra.mxu0 %v351
        %v436 = vpop.f32.mrf.mxu0
        %v437 = vadd.f32 %v314, %v436
        %v438 = vpop.f32.mrf.mxu0
        %v439 = vadd.f32 %v314, %v438
        %440 = vmatmul.bf16.gmra.mxu0 %v352
        %v441 = vpop.f32.mrf.mxu0
        %v442 = vadd.f32 %v314, %v441
        %v443 = vpop.f32.mrf.mxu0
        %v444 = vadd.f32 %v314, %v443
        %445 = vmatmul.bf16.gmra.mxu0 %v353
        %v446 = vpop.f32.mrf.mxu0
        %v447 = vadd.f32 %v314, %v446
        %v448 = vpop.f32.mrf.mxu0
        %v449 = vadd.f32 %v314, %v448
        %450 = vmatmul.bf16.gmra.mxu0 %v354
        %v451 = vpop.f32.mrf.mxu0
        %v452 = vadd.f32 %v314, %v451
        %v453 = vpop.f32.mrf.mxu0
        %v454 = vadd.f32 %v314, %v453
        %455 = vmatmul.bf16.gmra.mxu0 %v355
        %v456 = vpop.f32.mrf.mxu0
        %v457 = vadd.f32 %v314, %v456
        %v458 = vpop.f32.mrf.mxu0
        %v459 = vadd.f32 %v314, %v458
        %460 = vdwg.mxu0
        %v461 = vpack.c.bf16 %v422, %v422
        %v462 = vpack.c.bf16 %v424, %v424
        %v463 = vpack.c.bf16 %v427, %v427
        %v464 = vpack.c.bf16 %v429, %v429
        %v465 = vpack.c.bf16 %v432, %v432
        %v466 = vpack.c.bf16 %v434, %v434
        %v467 = vpack.c.bf16 %v437, %v437
        %v468 = vpack.c.bf16 %v439, %v439
        %v469 = vpack.c.bf16 %v442, %v442
        %v470 = vpack.c.bf16 %v444, %v444
        %v471 = vpack.c.bf16 %v447, %v447
        %v472 = vpack.c.bf16 %v449, %v449
        %v473 = vpack.c.bf16 %v452, %v452
        %v474 = vpack.c.bf16 %v454, %v454
        %v475 = vpack.c.bf16 %v457, %v457
        %v476 = vpack.c.bf16 %v459, %v459
        %v477 = vunpack.c.l.bf16 %v461
        %v478 = vunpack.c.l.bf16 %v462
        %v479 = vunpack.c.l.bf16 %v463
        %v480 = vunpack.c.l.bf16 %v464
        %v481 = vunpack.c.l.bf16 %v465
        %v482 = vunpack.c.l.bf16 %v466
        %v483 = vunpack.c.l.bf16 %v467
        %v484 = vunpack.c.l.bf16 %v468
        %v485 = vunpack.c.l.bf16 %v469
        %v486 = vunpack.c.l.bf16 %v470
        %v487 = vunpack.c.l.bf16 %v471
        %v488 = vunpack.c.l.bf16 %v472
        %v489 = vunpack.c.l.bf16 %v473
        %v490 = vunpack.c.l.bf16 %v474
        %v491 = vunpack.c.l.bf16 %v475
        %v492 = vunpack.c.l.bf16 %v476
        %v493 = vmul.f32 %v477, 0.5
        %v494 = vmul.f32 %v478, 0.5
        %v495 = vmul.f32 %v479, 0.5
        %v496 = vmul.f32 %v480, 0.5
        %v497 = vmul.f32 %v481, 0.5
        %v498 = vmul.f32 %v482, 0.5
        %v499 = vmul.f32 %v483, 0.5
        %v500 = vmul.f32 %v484, 0.5
        %v501 = vmul.f32 %v485, 0.5
        %v502 = vmul.f32 %v486, 0.5
        %v503 = vmul.f32 %v487, 0.5
        %v504 = vmul.f32 %v488, 0.5
        %v505 = vmul.f32 %v489, 0.5
        %v506 = vmul.f32 %v490, 0.5
        %v507 = vmul.f32 %v491, 0.5
        %v508 = vmul.f32 %v492, 0.5
        %v509 = vpack.c.bf16 %v493, %v493
        %v510 = vpack.c.bf16 %v494, %v494
        %v511 = vpack.c.bf16 %v495, %v495
        %v512 = vpack.c.bf16 %v496, %v496
        %v513 = vpack.c.bf16 %v497, %v497
        %v514 = vpack.c.bf16 %v498, %v498
        %v515 = vpack.c.bf16 %v499, %v499
        %v516 = vpack.c.bf16 %v500, %v500
        %v517 = vpack.c.bf16 %v501, %v501
        %v518 = vpack.c.bf16 %v502, %v502
        %v519 = vpack.c.bf16 %v503, %v503
        %v520 = vpack.c.bf16 %v504, %v504
        %v521 = vpack.c.bf16 %v505, %v505
        %v522 = vpack.c.bf16 %v506, %v506
        %v523 = vpack.c.bf16 %v507, %v507
        %v524 = vpack.c.bf16 %v508, %v508
        %v525 = vmul.f32 %v477, %v477
        %v526 = vmul.f32 %v478, %v478
        %v527 = vmul.f32 %v479, %v479
        %v528 = vmul.f32 %v480, %v480
        %v529 = vmul.f32 %v481, %v481
        %v530 = vmul.f32 %v482, %v482
        %v531 = vmul.f32 %v483, %v483
        %v532 = vmul.f32 %v484, %v484
        %v533 = vmul.f32 %v485, %v485
        %v534 = vmul.f32 %v486, %v486
        %v535 = vmul.f32 %v487, %v487
        %v536 = vmul.f32 %v488, %v488
        %v537 = vmul.f32 %v489, %v489
        %v538 = vmul.f32 %v490, %v490
        %v539 = vmul.f32 %v491, %v491
        %v540 = vmul.f32 %v492, %v492
        %v541 = vpack.c.bf16 %v525, %v525
        %v542 = vpack.c.bf16 %v526, %v526
        %v543 = vpack.c.bf16 %v527, %v527
        %v544 = vpack.c.bf16 %v528, %v528
        %v545 = vpack.c.bf16 %v529, %v529
        %v546 = vpack.c.bf16 %v530, %v530
        %v547 = vpack.c.bf16 %v531, %v531
        %v548 = vpack.c.bf16 %v532, %v532
        %v549 = vpack.c.bf16 %v533, %v533
        %v550 = vpack.c.bf16 %v534, %v534
        %v551 = vpack.c.bf16 %v535, %v535
        %v552 = vpack.c.bf16 %v536, %v536
        %v553 = vpack.c.bf16 %v537, %v537
        %v554 = vpack.c.bf16 %v538, %v538
        %v555 = vpack.c.bf16 %v539, %v539
        %v556 = vpack.c.bf16 %v540, %v540
        %v557 = vunpack.c.l.bf16 %v541
        %v558 = vunpack.c.l.bf16 %v542
        %v559 = vunpack.c.l.bf16 %v543
        %v560 = vunpack.c.l.bf16 %v544
        %v561 = vunpack.c.l.bf16 %v545
        %v562 = vunpack.c.l.bf16 %v546
        %v563 = vunpack.c.l.bf16 %v547
        %v564 = vunpack.c.l.bf16 %v548
        %v565 = vunpack.c.l.bf16 %v549
        %v566 = vunpack.c.l.bf16 %v550
        %v567 = vunpack.c.l.bf16 %v551
        %v568 = vunpack.c.l.bf16 %v552
        %v569 = vunpack.c.l.bf16 %v553
        %v570 = vunpack.c.l.bf16 %v554
        %v571 = vunpack.c.l.bf16 %v555
        %v572 = vunpack.c.l.bf16 %v556
        %v573 = vmul.f32 %v557, %v477
        %v574 = vmul.f32 %v558, %v478
        %v575 = vmul.f32 %v559, %v479
        %v576 = vmul.f32 %v560, %v480
        %v577 = vmul.f32 %v561, %v481
        %v578 = vmul.f32 %v562, %v482
        %v579 = vmul.f32 %v563, %v483
        %v580 = vmul.f32 %v564, %v484
        %v581 = vmul.f32 %v565, %v485
        %v582 = vmul.f32 %v566, %v486
        %v583 = vmul.f32 %v567, %v487
        %v584 = vmul.f32 %v568, %v488
        %v585 = vmul.f32 %v569, %v489
        %v586 = vmul.f32 %v570, %v490
        %v587 = vmul.f32 %v571, %v491
        %v588 = vmul.f32 %v572, %v492
        %v589 = vpack.c.bf16 %v573, %v573
        %v590 = vpack.c.bf16 %v574, %v574
        %v591 = vpack.c.bf16 %v575, %v575
        %v592 = vpack.c.bf16 %v576, %v576
        %v593 = vpack.c.bf16 %v577, %v577
        %v594 = vpack.c.bf16 %v578, %v578
        %v595 = vpack.c.bf16 %v579, %v579
        %v596 = vpack.c.bf16 %v580, %v580
        %v597 = vpack.c.bf16 %v581, %v581
        %v598 = vpack.c.bf16 %v582, %v582
        %v599 = vpack.c.bf16 %v583, %v583
        %v600 = vpack.c.bf16 %v584, %v584
        %v601 = vpack.c.bf16 %v585, %v585
        %v602 = vpack.c.bf16 %v586, %v586
        %v603 = vpack.c.bf16 %v587, %v587
        %v604 = vpack.c.bf16 %v588, %v588
        %v605 = vunpack.c.l.bf16 %v589
        %v606 = vunpack.c.l.bf16 %v590
        %v607 = vunpack.c.l.bf16 %v591
        %v608 = vunpack.c.l.bf16 %v592
        %v609 = vunpack.c.l.bf16 %v593
        %v610 = vunpack.c.l.bf16 %v594
        %v611 = vunpack.c.l.bf16 %v595
        %v612 = vunpack.c.l.bf16 %v596
        %v613 = vunpack.c.l.bf16 %v597
        %v614 = vunpack.c.l.bf16 %v598
        %v615 = vunpack.c.l.bf16 %v599
        %v616 = vunpack.c.l.bf16 %v600
        %v617 = vunpack.c.l.bf16 %v601
        %v618 = vunpack.c.l.bf16 %v602
        %v619 = vunpack.c.l.bf16 %v603
        %v620 = vunpack.c.l.bf16 %v604
        %v621 = vmul.f32 %v605, 0.044677734
        %v622 = vmul.f32 %v606, 0.044677734
        %v623 = vmul.f32 %v607, 0.044677734
        %v624 = vmul.f32 %v608, 0.044677734
        %v625 = vmul.f32 %v609, 0.044677734
        %v626 = vmul.f32 %v610, 0.044677734
        %v627 = vmul.f32 %v611, 0.044677734
        %v628 = vmul.f32 %v612, 0.044677734
        %v629 = vmul.f32 %v613, 0.044677734
        %v630 = vmul.f32 %v614, 0.044677734
        %v631 = vmul.f32 %v615, 0.044677734
        %v632 = vmul.f32 %v616, 0.044677734
        %v633 = vmul.f32 %v617, 0.044677734
        %v634 = vmul.f32 %v618, 0.044677734
        %v635 = vmul.f32 %v619, 0.044677734
        %v636 = vmul.f32 %v620, 0.044677734
        %v637 = vpack.c.bf16 %v621, %v621
        %v638 = vpack.c.bf16 %v622, %v622
        %v639 = vpack.c.bf16 %v623, %v623
        %v640 = vpack.c.bf16 %v624, %v624
        %v641 = vpack.c.bf16 %v625, %v625
        %v642 = vpack.c.bf16 %v626, %v626
        %v643 = vpack.c.bf16 %v627, %v627
        %v644 = vpack.c.bf16 %v628, %v628
        %v645 = vpack.c.bf16 %v629, %v629
        %v646 = vpack.c.bf16 %v630, %v630
        %v647 = vpack.c.bf16 %v631, %v631
        %v648 = vpack.c.bf16 %v632, %v632
        %v649 = vpack.c.bf16 %v633, %v633
        %v650 = vpack.c.bf16 %v634, %v634
        %v651 = vpack.c.bf16 %v635, %v635
        %v652 = vpack.c.bf16 %v636, %v636
        %v653 = vunpack.c.l.bf16 %v637
        %v654 = vunpack.c.l.bf16 %v638
        %v655 = vunpack.c.l.bf16 %v639
        %v656 = vunpack.c.l.bf16 %v640
        %v657 = vunpack.c.l.bf16 %v641
        %v658 = vunpack.c.l.bf16 %v642
        %v659 = vunpack.c.l.bf16 %v643
        %v660 = vunpack.c.l.bf16 %v644
        %v661 = vunpack.c.l.bf16 %v645
        %v662 = vunpack.c.l.bf16 %v646
        %v663 = vunpack.c.l.bf16 %v647
        %v664 = vunpack.c.l.bf16 %v648
        %v665 = vunpack.c.l.bf16 %v649
        %v666 = vunpack.c.l.bf16 %v650
        %v667 = vunpack.c.l.bf16 %v651
        %v668 = vunpack.c.l.bf16 %v652
        %v669 = vadd.f32 %v477, %v653
        %v670 = vadd.f32 %v478, %v654
        %v671 = vadd.f32 %v479, %v655
        %v672 = vadd.f32 %v480, %v656
        %v673 = vadd.f32 %v481, %v657
        %v674 = vadd.f32 %v482, %v658
        %v675 = vadd.f32 %v483, %v659
        %v676 = vadd.f32 %v484, %v660
        %v677 = vadd.f32 %v485, %v661
        %v678 = vadd.f32 %v486, %v662
        %v679 = vadd.f32 %v487, %v663
        %v680 = vadd.f32 %v488, %v664
        %v681 = vadd.f32 %v489, %v665
        %v682 = vadd.f32 %v490, %v666
        %v683 = vadd.f32 %v491, %v667
        %v684 = vadd.f32 %v492, %v668
        %v685 = vpack.c.bf16 %v669, %v669
        %v686 = vpack.c.bf16 %v670, %v670
        %v687 = vpack.c.bf16 %v671, %v671
        %v688 = vpack.c.bf16 %v672, %v672
        %v689 = vpack.c.bf16 %v673, %v673
        %v690 = vpack.c.bf16 %v674, %v674
        %v691 = vpack.c.bf16 %v675, %v675
        %v692 = vpack.c.bf16 %v676, %v676
        %v693 = vpack.c.bf16 %v677, %v677
        %v694 = vpack.c.bf16 %v678, %v678
        %v695 = vpack.c.bf16 %v679, %v679
        %v696 = vpack.c.bf16 %v680, %v680
        %v697 = vpack.c.bf16 %v681, %v681
        %v698 = vpack.c.bf16 %v682, %v682
        %v699 = vpack.c.bf16 %v683, %v683
        %v700 = vpack.c.bf16 %v684, %v684
        %v701 = vunpack.c.l.bf16 %v685
        %v702 = vunpack.c.l.bf16 %v686
        %v703 = vunpack.c.l.bf16 %v687
        %v704 = vunpack.c.l.bf16 %v688
        %v705 = vunpack.c.l.bf16 %v689
        %v706 = vunpack.c.l.bf16 %v690
        %v707 = vunpack.c.l.bf16 %v691
        %v708 = vunpack.c.l.bf16 %v692
        %v709 = vunpack.c.l.bf16 %v693
        %v710 = vunpack.c.l.bf16 %v694
        %v711 = vunpack.c.l.bf16 %v695
        %v712 = vunpack.c.l.bf16 %v696
        %v713 = vunpack.c.l.bf16 %v697
        %v714 = vunpack.c.l.bf16 %v698
        %v715 = vunpack.c.l.bf16 %v699
        %v716 = vunpack.c.l.bf16 %v700
        %v717 = vmul.f32 %v701, 0.796875
        %v718 = vmul.f32 %v702, 0.796875
        %v719 = vmul.f32 %v703, 0.796875
        %v720 = vmul.f32 %v704, 0.796875
        %v721 = vmul.f32 %v705, 0.796875
        %v722 = vmul.f32 %v706, 0.796875
        %v723 = vmul.f32 %v707, 0.796875
        %v724 = vmul.f32 %v708, 0.796875
        %v725 = vmul.f32 %v709, 0.796875
        %v726 = vmul.f32 %v710, 0.796875
        %v727 = vmul.f32 %v711, 0.796875
        %v728 = vmul.f32 %v712, 0.796875
        %v729 = vmul.f32 %v713, 0.796875
        %v730 = vmul.f32 %v714, 0.796875
        %v731 = vmul.f32 %v715, 0.796875
        %v732 = vmul.f32 %v716, 0.796875
        %v733 = vpack.c.bf16 %v717, %v717
        %v734 = vpack.c.bf16 %v718, %v718
        %v735 = vpack.c.bf16 %v719, %v719
        %v736 = vpack.c.bf16 %v720, %v720
        %v737 = vpack.c.bf16 %v721, %v721
        %v738 = vpack.c.bf16 %v722, %v722
        %v739 = vpack.c.bf16 %v723, %v723
        %v740 = vpack.c.bf16 %v724, %v724
        %v741 = vpack.c.bf16 %v725, %v725
        %v742 = vpack.c.bf16 %v726, %v726
        %v743 = vpack.c.bf16 %v727, %v727
        %v744 = vpack.c.bf16 %v728, %v728
        %v745 = vpack.c.bf16 %v729, %v729
        %v746 = vpack.c.bf16 %v730, %v730
        %v747 = vpack.c.bf16 %v731, %v731
        %v748 = vpack.c.bf16 %v732, %v732
        %v749 = vunpack.c.l.bf16 %v733
        %v750 = vunpack.c.l.bf16 %v734
        %v751 = vunpack.c.l.bf16 %v735
        %v752 = vunpack.c.l.bf16 %v736
        %v753 = vunpack.c.l.bf16 %v737
        %v754 = vunpack.c.l.bf16 %v738
        %v755 = vunpack.c.l.bf16 %v739
        %v756 = vunpack.c.l.bf16 %v740
        %v757 = vunpack.c.l.bf16 %v741
        %v758 = vunpack.c.l.bf16 %v742
        %v759 = vunpack.c.l.bf16 %v743
        %v760 = vunpack.c.l.bf16 %v744
        %v761 = vunpack.c.l.bf16 %v745
        %v762 = vunpack.c.l.bf16 %v746
        %v763 = vunpack.c.l.bf16 %v747
        %v764 = vunpack.c.l.bf16 %v748
        %v765 = vtanh.pop %v749
        %v766 = vtanh.pop %v750
        %v767 = vtanh.pop %v751
        %v768 = vtanh.pop %v752
        %v769 = vtanh.pop %v753
        %v770 = vtanh.pop %v754
        %v771 = vtanh.pop %v755
        %v772 = vtanh.pop %v756
        %v773 = vtanh.pop %v757
        %v774 = vtanh.pop %v758
        %v775 = vtanh.pop %v759
        %v776 = vtanh.pop %v760
        %v777 = vtanh.pop %v761
        %v778 = vtanh.pop %v762
        %v779 = vtanh.pop %v763
        %v780 = vtanh.pop %v764
        %v781 = vpack.c.bf16 %v765, %v765
        %v782 = vpack.c.bf16 %v766, %v766
        %v783 = vpack.c.bf16 %v767, %v767
        %v784 = vpack.c.bf16 %v768, %v768
        %v785 = vpack.c.bf16 %v769, %v769
        %v786 = vpack.c.bf16 %v770, %v770
        %v787 = vpack.c.bf16 %v771, %v771
        %v788 = vpack.c.bf16 %v772, %v772
        %v789 = vpack.c.bf16 %v773, %v773
        %v790 = vpack.c.bf16 %v774, %v774
        %v791 = vpack.c.bf16 %v775, %v775
        %v792 = vpack.c.bf16 %v776, %v776
        %v793 = vpack.c.bf16 %v777, %v777
        %v794 = vpack.c.bf16 %v778, %v778
        %v795 = vpack.c.bf16 %v779, %v779
        %v796 = vpack.c.bf16 %v780, %v780
        %v797 = vunpack.c.l.bf16 %v781
        %v798 = vunpack.c.l.bf16 %v782
        %v799 = vunpack.c.l.bf16 %v783
        %v800 = vunpack.c.l.bf16 %v784
        %v801 = vunpack.c.l.bf16 %v785
        %v802 = vunpack.c.l.bf16 %v786
        %v803 = vunpack.c.l.bf16 %v787
        %v804 = vunpack.c.l.bf16 %v788
        %v805 = vunpack.c.l.bf16 %v789
        %v806 = vunpack.c.l.bf16 %v790
        %v807 = vunpack.c.l.bf16 %v791
        %v808 = vunpack.c.l.bf16 %v792
        %v809 = vunpack.c.l.bf16 %v793
        %v810 = vunpack.c.l.bf16 %v794
        %v811 = vunpack.c.l.bf16 %v795
        %v812 = vunpack.c.l.bf16 %v796
        %v813 = vadd.f32 %v797, 1.0
        %v814 = vadd.f32 %v798, 1.0
        %v815 = vadd.f32 %v799, 1.0
        %v816 = vadd.f32 %v800, 1.0
        %v817 = vadd.f32 %v801, 1.0
        %v818 = vadd.f32 %v802, 1.0
        %v819 = vadd.f32 %v803, 1.0
        %v820 = vadd.f32 %v804, 1.0
        %v821 = vadd.f32 %v805, 1.0
        %v822 = vadd.f32 %v806, 1.0
        %v823 = vadd.f32 %v807, 1.0
        %v824 = vadd.f32 %v808, 1.0
        %v825 = vadd.f32 %v809, 1.0
        %v826 = vadd.f32 %v810, 1.0
        %v827 = vadd.f32 %v811, 1.0
        %v828 = vadd.f32 %v812, 1.0
        %v829 = vpack.c.bf16 %v813, %v813
        %v830 = vpack.c.bf16 %v814, %v814
        %v831 = vpack.c.bf16 %v815, %v815
        %v832 = vpack.c.bf16 %v816, %v816
        %v833 = vpack.c.bf16 %v817, %v817
        %v834 = vpack.c.bf16 %v818, %v818
        %v835 = vpack.c.bf16 %v819, %v819
        %v836 = vpack.c.bf16 %v820, %v820
        %v837 = vpack.c.bf16 %v821, %v821
        %v838 = vpack.c.bf16 %v822, %v822
        %v839 = vpack.c.bf16 %v823, %v823
        %v840 = vpack.c.bf16 %v824, %v824
        %v841 = vpack.c.bf16 %v825, %v825
        %v842 = vpack.c.bf16 %v826, %v826
        %v843 = vpack.c.bf16 %v827, %v827
        %v844 = vpack.c.bf16 %v828, %v828
        %v845 = vunpack.c.l.bf16 %v509
        %v846 = vunpack.c.l.bf16 %v510
        %v847 = vunpack.c.l.bf16 %v511
        %v848 = vunpack.c.l.bf16 %v512
        %v849 = vunpack.c.l.bf16 %v513
        %v850 = vunpack.c.l.bf16 %v514
        %v851 = vunpack.c.l.bf16 %v515
        %v852 = vunpack.c.l.bf16 %v516
        %v853 = vunpack.c.l.bf16 %v517
        %v854 = vunpack.c.l.bf16 %v518
        %v855 = vunpack.c.l.bf16 %v519
        %v856 = vunpack.c.l.bf16 %v520
        %v857 = vunpack.c.l.bf16 %v521
        %v858 = vunpack.c.l.bf16 %v522
        %v859 = vunpack.c.l.bf16 %v523
        %v860 = vunpack.c.l.bf16 %v524
        %v861 = vunpack.c.l.bf16 %v829
        %v862 = vunpack.c.l.bf16 %v830
        %v863 = vunpack.c.l.bf16 %v831
        %v864 = vunpack.c.l.bf16 %v832
        %v865 = vunpack.c.l.bf16 %v833
        %v866 = vunpack.c.l.bf16 %v834
        %v867 = vunpack.c.l.bf16 %v835
        %v868 = vunpack.c.l.bf16 %v836
        %v869 = vunpack.c.l.bf16 %v837
        %v870 = vunpack.c.l.bf16 %v838
        %v871 = vunpack.c.l.bf16 %v839
        %v872 = vunpack.c.l.bf16 %v840
        %v873 = vunpack.c.l.bf16 %v841
        %v874 = vunpack.c.l.bf16 %v842
        %v875 = vunpack.c.l.bf16 %v843
        %v876 = vunpack.c.l.bf16 %v844
        %v877 = vmul.f32 %v845, %v861
        %v878 = vmul.f32 %v846, %v862
        %v879 = vmul.f32 %v847, %v863
        %v880 = vmul.f32 %v848, %v864
        %v881 = vmul.f32 %v849, %v865
        %v882 = vmul.f32 %v850, %v866
        %v883 = vmul.f32 %v851, %v867
        %v884 = vmul.f32 %v852, %v868
        %v885 = vmul.f32 %v853, %v869
        %v886 = vmul.f32 %v854, %v870
        %v887 = vmul.f32 %v855, %v871
        %v888 = vmul.f32 %v856, %v872
        %v889 = vmul.f32 %v857, %v873
        %v890 = vmul.f32 %v858, %v874
        %v891 = vmul.f32 %v859, %v875
        %v892 = vmul.f32 %v860, %v876
        %v893 = vpack.c.bf16 %v878, %v877
        %v894 = vpack.c.bf16 %v880, %v879
        %v895 = vpack.c.bf16 %v882, %v881
        %v896 = vpack.c.bf16 %v884, %v883
        %v897 = vpack.c.bf16 %v886, %v885
        %v898 = vpack.c.bf16 %v888, %v887
        %v899 = vpack.c.bf16 %v890, %v889
        %v900 = vpack.c.bf16 %v892, %v891
        %v901 = vld [vmem:[%s3] sm:$0xf]
        %v902 = vld [vmem:[%s3 + $0x4] sm:$0xf]
        %v903 = vld [vmem:[%s3 + $0x8] sm:$0xf]
        %v904 = vld [vmem:[%s3 + $0xc] sm:$0xf]
        %v905 = vld [vmem:[%s3 + $0x10] sm:$0xf]
        %v906 = vld [vmem:[%s3 + $0x14] sm:$0xf]
        %v907 = vld [vmem:[%s3 + $0x18] sm:$0xf]
        %v908 = vld [vmem:[%s3 + $0x1c] sm:$0xf]
        %v909 = vld [vmem:[%s3 + $0x20] sm:$0xf]
        %v910 = vld [vmem:[%s3 + $0x24] sm:$0xf]
        %v911 = vld [vmem:[%s3 + $0x28] sm:$0xf]
        %v912 = vld [vmem:[%s3 + $0x2c] sm:$0xf]
        %v913 = vld [vmem:[%s3 + $0x30] sm:$0xf]
        %v914 = vld [vmem:[%s3 + $0x34] sm:$0xf]
        %v915 = vld [vmem:[%s3 + $0x38] sm:$0xf]
        %v916 = vld [vmem:[%s3 + $0x3c] sm:$0xf]
        %v917 = vld [vmem:[%s4] sm:$0x1]
        %v919 = vperm.slane %v917, 0
        %v937 = vunpack.c.l.b16 %v901
        %v938 = vunpack.c.l.b16 %v902
        %v939 = vunpack.c.l.b16 %v903
        %v940 = vunpack.c.l.b16 %v904
        %v941 = vunpack.c.l.b16 %v905
        %v942 = vunpack.c.l.b16 %v906
        %v943 = vunpack.c.l.b16 %v907
        %v944 = vunpack.c.l.b16 %v908
        %v945 = vunpack.c.l.b16 %v909
        %v946 = vunpack.c.l.b16 %v910
        %v947 = vunpack.c.l.b16 %v911
        %v948 = vunpack.c.l.b16 %v912
        %v949 = vunpack.c.l.b16 %v913
        %v950 = vunpack.c.l.b16 %v914
        %v951 = vunpack.c.l.b16 %v915
        %v952 = vunpack.c.l.b16 %v916
        %v953 = vpack.c.b16 %v938, %v937
        %v954 = vpack.c.b16 %v940, %v939
        %v955 = vpack.c.b16 %v942, %v941
        %v956 = vpack.c.b16 %v944, %v943
        %v957 = vpack.c.b16 %v946, %v945
        %v958 = vpack.c.b16 %v948, %v947
        %v959 = vpack.c.b16 %v950, %v949
        %v960 = vpack.c.b16 %v952, %v951
        %969 = vmatpush.bf16.msra.mxu0 %v960
        %970 = vmatpush.bf16.msra.mxu0 %v959
        %971 = vmatpush.bf16.msra.mxu0 %v958
        %972 = vmatpush.bf16.msra.mxu0 %v957
        %973 = vmatpush.bf16.msra.mxu0 %v956
        %974 = vmatpush.bf16.msra.mxu0 %v955
        %975 = vmatpush.bf16.msra.mxu0 %v954
        %976 = vmatpush.bf16.msra.mxu0 %v953
        %977 = vmatmul.bf16.gmra.mxu0 %v893
        %v978 = vpop.f32.mrf.mxu0
        %v979 = vadd.f32 %v919, %v978
        %v980 = vpop.f32.mrf.mxu0
        %v981 = vadd.f32 %v919, %v980
        %982 = vmatmul.bf16.gmra.mxu0 %v894
        %v983 = vpop.f32.mrf.mxu0
        %v984 = vadd.f32 %v919, %v983
        %v985 = vpop.f32.mrf.mxu0
        %v986 = vadd.f32 %v919, %v985
        %987 = vmatmul.bf16.gmra.mxu0 %v895
        %v988 = vpop.f32.mrf.mxu0
        %v989 = vadd.f32 %v919, %v988
        %v990 = vpop.f32.mrf.mxu0
        %v991 = vadd.f32 %v919, %v990
        %992 = vmatmul.bf16.gmra.mxu0 %v896
        %v993 = vpop.f32.mrf.mxu0
        %v994 = vadd.f32 %v919, %v993
        %v995 = vpop.f32.mrf.mxu0
        %v996 = vadd.f32 %v919, %v995
        %997 = vmatmul.bf16.gmra.mxu0 %v897
        %v998 = vpop.f32.mrf.mxu0
        %v999 = vadd.f32 %v919, %v998
        %v1000 = vpop.f32.mrf.mxu0
        %v1001 = vadd.f32 %v919, %v1000
        %1002 = vmatmul.bf16.gmra.mxu0 %v898
        %v1003 = vpop.f32.mrf.mxu0
        %v1004 = vadd.f32 %v919, %v1003
        %v1005 = vpop.f32.mrf.mxu0
        %v1006 = vadd.f32 %v919, %v1005
        %1007 = vmatmul.bf16.gmra.mxu0 %v899
        %v1008 = vpop.f32.mrf.mxu0
        %v1009 = vadd.f32 %v919, %v1008
        %v1010 = vpop.f32.mrf.mxu0
        %v1011 = vadd.f32 %v919, %v1010
        %1012 = vmatmul.bf16.gmra.mxu0 %v900
        %v1013 = vpop.f32.mrf.mxu0
        %v1014 = vadd.f32 %v919, %v1013
        %v1015 = vpop.f32.mrf.mxu0
        %v1016 = vadd.f32 %v919, %v1015
        %1017 = vdwg.mxu0
        %v1018 = vpack.c.bf16 %v979, %v979
        %v1019 = vpack.c.bf16 %v981, %v981
        %v1020 = vpack.c.bf16 %v984, %v984
        %v1021 = vpack.c.bf16 %v986, %v986
        %v1022 = vpack.c.bf16 %v989, %v989
        %v1023 = vpack.c.bf16 %v991, %v991
        %v1024 = vpack.c.bf16 %v994, %v994
        %v1025 = vpack.c.bf16 %v996, %v996
        %v1026 = vpack.c.bf16 %v999, %v999
        %v1027 = vpack.c.bf16 %v1001, %v1001
        %v1028 = vpack.c.bf16 %v1004, %v1004
        %v1029 = vpack.c.bf16 %v1006, %v1006
        %v1030 = vpack.c.bf16 %v1009, %v1009
        %v1031 = vpack.c.bf16 %v1011, %v1011
        %v1032 = vpack.c.bf16 %v1014, %v1014
        %v1033 = vpack.c.bf16 %v1016, %v1016
        %1034 = vst [vmem:[%s218] sm:$0xf] %v1018
        %1035 = vst [vmem:[%s218 + $0x4] sm:$0xf] %v1019
        %1036 = vst [vmem:[%s218 + $0x8] sm:$0xf] %v1020
        %1037 = vst [vmem:[%s218 + $0xc] sm:$0xf] %v1021
        %1038 = vst [vmem:[%s218 + $0x10] sm:$0xf] %v1022
        %1039 = vst [vmem:[%s218 + $0x14] sm:$0xf] %v1023
        %1040 = vst [vmem:[%s218 + $0x18] sm:$0xf] %v1024
        %1041 = vst [vmem:[%s218 + $0x1c] sm:$0xf] %v1025
        %1042 = vst [vmem:[%s218 + $0x20] sm:$0xf] %v1026
        %1043 = vst [vmem:[%s218 + $0x24] sm:$0xf] %v1027
        %1044 = vst [vmem:[%s218 + $0x28] sm:$0xf] %v1028
        %1045 = vst [vmem:[%s218 + $0x2c] sm:$0xf] %v1029
        %1046 = vst [vmem:[%s218 + $0x30] sm:$0xf] %v1030
        %1047 = vst [vmem:[%s218 + $0x34] sm:$0xf] %v1031
        %1048 = vst [vmem:[%s218 + $0x38] sm:$0xf] %v1032
        %1049 = vst [vmem:[%s218 + $0x3c] sm:$0xf] %v1033
        %s1050 = sand.u32 %s137, 1
        %s1051 = scalar_lea.sflag [#allocation4], %s1050
        %s1052 = sand.u32 %s137, 1
        %s1053 = smul.addr %s1052, 64
        %s1054 = scalar_lea.vmem [#allocation3], %s1053
        // Predicated region
        $region45: #{tpu_custom_call.1} parent=39 // pred_check
          %p1055 = pneg %p147
        $region46: #{tpu_custom_call.1} parent=39 // pred_check_branch
          %1057 = sbr.rel (%p1055) target = $region48
        $region47: #{tpu_custom_call.1} parent=39 // pred_region
          %s1058 = smul.u32 16, %s19
          %1060 = vsyncadd %s1051, 0
          %s1061 = smul.addr %s1058, 4
          %s1062 = scalar_lea.hbm %s5, %s1061
          %s1063 = sshll.u32 %s1054, 4
          %s1064 = int_to_ptr.vmem [resolvable:$true] %s1063
          %s1065 = sshll.u32 %s1062, 4
          %s1066 = int_to_ptr.hbm [resolvable:$true] %s1065
          %1071 = dma.vmem_to_hbm [thread:$0]  %s1064, 1024, %s1066, %s1051, 64, 64, 4
        $region48: #{tpu_custom_call.1} parent=39 // pred_fallthru
          _
      $region40: #{tpu_custom_call.1} parent=5 // pred_fallthru
        _
      %p1072 = scmp.le.s32.totalorder 2, %s14
      // Predicated region
      $region49: #{tpu_custom_call.1} parent=5 // pred_check
        %p1073 = pneg %p1072
      $region50: #{tpu_custom_call.1} parent=5 // pred_check_branch
        %1075 = sbr.rel (%p1073) target = $region52
      $region51: #{tpu_custom_call.1} parent=5 // pred_region
        %s1076 = ssub.s32 %s14, 2
        // Predicated region
        $region53: #{tpu_custom_call.1} parent=51 // pred_check
          %p1077 = pneg %p153
        $region54: #{tpu_custom_call.1} parent=51 // pred_check_branch
          %1079 = sbr.rel (%p1077) target = $region56
        $region55: #{tpu_custom_call.1} parent=51 // pred_region
          %s1080 = sand.u32 %s138, 1
          %s1081 = scalar_lea.sflag [#allocation4], %s1080
          %s1082 = sand.u32 %s138, 1
          %s1083 = smul.addr %s1082, 64
          %s1084 = scalar_lea.vmem [#allocation3], %s1083
          %1086 = dma.done %s1081, 1024
        $region56: #{tpu_custom_call.1} parent=51 // pred_fallthru
          _
      $region52: #{tpu_custom_call.1} parent=5 // pred_fallthru
        _
    $region6: #{tpu_custom_call.1} parent=1 // loop_footer
      %s18 = sadd.s32 1, %s14
    $region7: #{tpu_custom_call.1} parent=1 // loop_footer_branch
      %13 = sbr.rel target = $region3
    $region8: #{tpu_custom_call.1} parent=1 // loop_exit
      _
    %1087 = vsyncpa [#allocation4], 1
    %s1088 = scalar_lea.sflag [#allocation4], 1
    %1089 = vsyncpa %s1088, 1

</llo_original>
